<compile_context>
chip_gen: v7x
topology: tpu7x:2x2x1
jax: 0.10.0
libtpu: 0.0.40
codegen_flags: <defaults>
</compile_context>

<pallas_src>
import functools

import jax
import jax.numpy as jnp
from jax.experimental import pallas as pl
from jax.experimental.pallas import tpu as pltpu


def _conv1x1_relu_clamp_kernel(x_ref, w_ref, b_ref, o_ref, *, lo, hi):
    # x_ref: (N_TILE, C_in, L)   L on lanes, C_in on sublanes
    # w_ref: (C_out, C_in)
    # b_ref: (C_out, 1)
    # o_ref: (N_TILE, C_out, L)
    x = x_ref[...]
    w = w_ref[...]
    b = b_ref[...]

    c_in = x_ref.shape[1]

    # y[n, o, l] = b[o] + sum_c w[o, c] * x[n, c, l]
    # Tiny contraction (C_in = 3): unrolled VPU broadcast-FMA, no MXU.
    y = b[None, :, :]                                   # (1, C_out, 1)
    for c in range(c_in):
        y = y + w[None, :, c:c + 1] * x[:, c:c + 1, :]  # -> (N_TILE, C_out, L)

    # ReLU + clamp_min fused into max(y, lo) (lo = max(min_val, 0) is a compile-
    # time immediate); clamp_max applied last.
    o_ref[...] = jnp.minimum(jnp.maximum(y, lo), hi).astype(o_ref.dtype)


def _choose_n_tile(n, c_in, c_out, l, budget_bytes=24 * 1024 * 1024):
    """Largest divisor of n whose double-buffered in+out footprint fits budget,
    while keeping >= 2 grid blocks when n >= 2 (v7x has 2 TensorCores)."""
    per_n_bytes = 2 * l * 4 * (c_in + c_out)          # double-buffered x + out per batch row
    max_tile = max(1, budget_bytes // per_n_bytes)
    if n >= 2:
        max_tile = min(max_tile, max(1, n // 2))      # ensure grid size >= 2
    tile = 1
    for d in range(1, min(n, max_tile) + 1):
        if n % d == 0:
            tile = d
    return tile


@functools.partial(jax.jit, static_argnums=(3, 4))
def conv1x1_relu_clamp(x_ncl, weight, bias, min_val, max_val):
    """x_ncl: (N, C_in, L) f32; weight: (C_out, C_in); bias: (C_out,).
    Returns clamp_max(clamp_min(relu(conv1x1(x)), min_val), max_val), shape (N, C_out, L)."""
    n, c_in, l = x_ncl.shape
    c_out = weight.shape[0]

    # relu(y) then clamp_min(min) == max(y, max(min, 0)); clamp_max applied last.
    lo = max(float(min_val), 0.0)
    hi = float(max_val)

    n_tile = _choose_n_tile(n, c_in, c_out, l)
    grid = (n // n_tile,)

    kernel = functools.partial(_conv1x1_relu_clamp_kernel, lo=lo, hi=hi)

    flops = 2 * n * c_out * c_in * l
    bytes_accessed = 4 * (n * l * (c_in + c_out) + c_out * (c_in + 1))

    return pl.pallas_call(
        kernel,
        out_shape=jax.ShapeDtypeStruct((n, c_out, l), jnp.float32),
        grid=grid,
        in_specs=[
            pl.BlockSpec((n_tile, c_in, l), lambda i: (i, 0, 0)),   # x: contiguous NCL slab
            pl.BlockSpec((c_out, c_in), lambda i: (0, 0)),          # W resident
            pl.BlockSpec((c_out, 1), lambda i: (0, 0)),             # bias resident
        ],
        out_specs=pl.BlockSpec((n_tile, c_out, l), lambda i: (i, 0, 0)),
        compiler_params=pltpu.CompilerParams(
            dimension_semantics=("parallel",),
            vmem_limit_bytes=48 * 1024 * 1024,
        ),
        cost_estimate=pl.CostEstimate(
            flops=flops, transcendentals=0, bytes_accessed=bytes_accessed),
    )(x_ncl, weight.astype(jnp.float32), bias.reshape(c_out, 1).astype(jnp.float32))


def _reference(x, w, b, mn, mx):
    y = jnp.einsum("oc,ncl->nol", w, x) + b[None, :, None]
    y = jnp.maximum(y, 0.0)          # ReLU
    y = jnp.maximum(y, mn)           # clamp_min
    y = jnp.minimum(y, mx)           # clamp_max
    return y


if __name__ == "__main__":
    key = jax.random.PRNGKey(0)
    k_x, k_w, k_b = jax.random.split(key, 3)

    N, C_IN, L, C_OUT = 2, 3, 128, 8
    x = jax.random.normal(k_x, (N, C_IN, L), dtype=jnp.float32)

    # Conv1d-style init: U(-1/sqrt(fan_in), 1/sqrt(fan_in))
    bound = 1.0 / (C_IN ** 0.5)
    weight = jax.random.uniform(k_w, (C_OUT, C_IN), jnp.float32, -bound, bound)
    bias = jax.random.uniform(k_b, (C_OUT,), jnp.float32, -bound, bound)

    # Case 1: min < 0 < max so the conv/bias path is actually exercised.
    out1 = conv1x1_relu_clamp(x, weight, bias, -0.25, 0.75)
    jax.block_until_ready(out1)
    ref1 = _reference(x, weight, bias, -0.25, 0.75)
    assert out1.shape == (N, C_OUT, L)
    assert jnp.allclose(out1, ref1, atol=1e-5, rtol=1e-5)

    # Case 2: the spec's defaults (min = max = 1) -> constant-1 output.
    out2 = conv1x1_relu_clamp(x, weight, bias, 1.0, 1.0)
    jax.block_until_ready(out2)
    ref2 = _reference(x, weight, bias, 1.0, 1.0)
    assert jnp.allclose(out2, ref2, atol=1e-5, rtol=1e-5)

    print("KERNEL_OK")
</pallas_src>

<mosaic_0001>
module attributes {stable_mosaic.version = 11 : i64} {
  func.func @_conv1x1_relu_clamp_kernel(%arg0: i32, %arg1: memref<1x3x128xf32, #tpu.memory_space<vmem>>, %arg2: memref<8x3xf32, #tpu.memory_space<vmem>>, %arg3: memref<8x1xf32, #tpu.memory_space<vmem>>, %arg4: memref<1x8x128xf32, #tpu.memory_space<vmem>>) attributes {dimension_semantics = [#tpu.dimension_semantics<parallel>], iteration_bounds = array<i64: 2>, scalar_prefetch = 0 : i64, scratch_operands = 0 : i64, tpu.core_type = #tpu.core_type<tc>, window_params = [{transform_indices = @transform_0, window_bounds = array<i64: 1, 3, 128>}, {pipeline_mode = #tpu.pipeline_mode<synchronous>, transform_indices = @transform_1, window_bounds = array<i64: 8, 3>}, {pipeline_mode = #tpu.pipeline_mode<synchronous>, transform_indices = @transform_2, window_bounds = array<i64: 8, 1>}, {transform_indices = @transform_3, window_bounds = array<i64: 1, 8, 128>}]} {
    %c0 = arith.constant 0 : index
    %c0_0 = arith.constant 0 : index
    %c0_1 = arith.constant 0 : index
    %0 = vector.load %arg1[%c0, %c0_0, %c0_1] : memref<1x3x128xf32, #tpu.memory_space<vmem>>, vector<1x3x128xf32>
    %c0_2 = arith.constant 0 : index
    %c0_3 = arith.constant 0 : index
    %1 = vector.load %arg2[%c0_2, %c0_3] : memref<8x3xf32, #tpu.memory_space<vmem>>, vector<8x3xf32>
    %c0_4 = arith.constant 0 : index
    %c0_5 = arith.constant 0 : index
    %2 = vector.load %arg3[%c0_4, %c0_5] : memref<8x1xf32, #tpu.memory_space<vmem>>, vector<8x1xf32>
    %3 = vector.shape_cast %2 : vector<8x1xf32> to vector<1x8x1xf32>
    %4 = vector.extract_strided_slice %1 {offsets = [0, 0], sizes = [8, 1], strides = [1, 1]} : vector<8x3xf32> to vector<8x1xf32>
    %5 = vector.shape_cast %4 : vector<8x1xf32> to vector<1x8x1xf32>
    %6 = vector.extract_strided_slice %0 {offsets = [0, 0, 0], sizes = [1, 1, 128], strides = [1, 1, 1]} : vector<1x3x128xf32> to vector<1x1x128xf32>
    %7 = vector.broadcast %5 : vector<1x8x1xf32> to vector<1x8x128xf32>
    %8 = vector.broadcast %6 : vector<1x1x128xf32> to vector<1x8x128xf32>
    %9 = arith.mulf %7, %8 : vector<1x8x128xf32>
    %10 = vector.broadcast %3 : vector<1x8x1xf32> to vector<1x8x128xf32>
    %11 = arith.addf %10, %9 : vector<1x8x128xf32>
    %12 = vector.extract_strided_slice %1 {offsets = [0, 1], sizes = [8, 1], strides = [1, 1]} : vector<8x3xf32> to vector<8x1xf32>
    %13 = vector.shape_cast %12 : vector<8x1xf32> to vector<1x8x1xf32>
    %14 = vector.extract_strided_slice %0 {offsets = [0, 1, 0], sizes = [1, 1, 128], strides = [1, 1, 1]} : vector<1x3x128xf32> to vector<1x1x128xf32>
    %15 = vector.broadcast %13 : vector<1x8x1xf32> to vector<1x8x128xf32>
    %16 = vector.broadcast %14 : vector<1x1x128xf32> to vector<1x8x128xf32>
    %17 = arith.mulf %15, %16 : vector<1x8x128xf32>
    %18 = arith.addf %11, %17 : vector<1x8x128xf32>
    %19 = vector.extract_strided_slice %1 {offsets = [0, 2], sizes = [8, 1], strides = [1, 1]} : vector<8x3xf32> to vector<8x1xf32>
    %20 = vector.shape_cast %19 : vector<8x1xf32> to vector<1x8x1xf32>
    %21 = vector.extract_strided_slice %0 {offsets = [0, 2, 0], sizes = [1, 1, 128], strides = [1, 1, 1]} : vector<1x3x128xf32> to vector<1x1x128xf32>
    %22 = vector.broadcast %20 : vector<1x8x1xf32> to vector<1x8x128xf32>
    %23 = vector.broadcast %21 : vector<1x1x128xf32> to vector<1x8x128xf32>
    %24 = arith.mulf %22, %23 : vector<1x8x128xf32>
    %25 = arith.addf %18, %24 : vector<1x8x128xf32>
    %cst = arith.constant 0.000000e+00 : f32
    %26 = vector.broadcast %cst : f32 to vector<1x8x128xf32>
    %27 = arith.maximumf %25, %26 : vector<1x8x128xf32>
    %cst_6 = arith.constant 7.500000e-01 : f32
    %28 = vector.broadcast %cst_6 : f32 to vector<1x8x128xf32>
    %29 = arith.minimumf %27, %28 : vector<1x8x128xf32>
    %c0_7 = arith.constant 0 : index
    %c0_8 = arith.constant 0 : index
    %c0_9 = arith.constant 0 : index
    %30 = vector.load %arg4[%c0_7, %c0_8, %c0_9] : memref<1x8x128xf32, #tpu.memory_space<vmem>>, vector<1x8x128xf32>
    tpu.vector_store %arg4[%c0_7, %c0_8, %c0_9], %29 {strides = array<i32>} : memref<1x8x128xf32, #tpu.memory_space<vmem>>, vector<1x8x128xf32>,
    return
  }
  func.func @transform_0(%arg0: i32) -> (i32, i32, i32) {
    %c0_i32 = arith.constant 0 : i32
    %c0_i32_0 = arith.constant 0 : i32
    %c0_i32_1 = arith.constant 0 : i32
    return %arg0, %c0_i32, %c0_i32_0 : i32, i32, i32
  }
  func.func @transform_1(%arg0: i32) -> (i32, i32) {
    %c0_i32 = arith.constant 0 : i32
    %c0_i32_0 = arith.constant 0 : i32
    %c0_i32_1 = arith.constant 0 : i32
    return %c0_i32, %c0_i32_0 : i32, i32
  }
  func.func @transform_2(%arg0: i32) -> (i32, i32) {
    %c0_i32 = arith.constant 0 : i32
    %c0_i32_0 = arith.constant 0 : i32
    %c0_i32_1 = arith.constant 0 : i32
    return %c0_i32, %c0_i32_0 : i32, i32
  }
  func.func @transform_3(%arg0: i32) -> (i32, i32, i32) {
    %c0_i32 = arith.constant 0 : i32
    %c0_i32_0 = arith.constant 0 : i32
    %c0_i32_1 = arith.constant 0 : i32
    return %arg0, %c0_i32, %c0_i32_0 : i32, i32, i32
  }
}

</mosaic_0001>

<llo_original>
// kernel: conv1x1_relu_clamp.1
$region0: #{conv1x1_relu_clamp.1}
  #allocation0 [shape = 'u32[]', space=smem, size = 0x4, offset = 0x4, fixed_abs, tag = 'smem constant byte address 0x4 - core index']
  #allocation1 [shape = 'u32[144,128]{1,0:T(1,128)}', space=vmem, size = 0x12000, scoped, tag = 'internal scratch']
  %s0 = inlined_call_operand.vmem [shape: f32[2,3,128], index: 0, kind: input, shape index: {}]
  %s1 = inlined_call_operand.vmem [shape: f32[8,3], index: 1, kind: input, shape index: {}]
  %s2 = inlined_call_operand.vmem [shape: f32[8,1], index: 2, kind: input, shape index: {}]
  %s3 = inlined_call_operand.hbm [shape: f32[2,8,128], index: 3, kind: output, shape index: {}]
  %s4 = sld [smem:[#allocation0]]
  $region45: #{conv1x1_relu_clamp.1} parent=0
    _
  %s6 = ssub.s32 1, %s4
  %s7 = scalar_select 0, %s6, %s4
  $region1: #{conv1x1_relu_clamp.1} parent=0
    #allocation2 [shape = 'u8[8192]{0}', space=vmem, size = 0x2000, scoped, tag = 'output window, operand 0']
    #allocation3 [shape = 's32[2]{0}', space=sflag, size = 0x8, scoped, tag = 'scoped memory for conv1x1_relu_clamp.1']
    %8 = vsyncpa [#allocation3], 0
    %s9 = scalar_lea.sflag [#allocation3], 1
    %10 = vsyncpa %s9, 0
    loop: start=0, step=1, limit=4
    $region2: #{conv1x1_relu_clamp.1} parent=1 // loop_pre_header
      _
    $region3: #{conv1x1_relu_clamp.1} parent=1 // loop_header
      %s12 = sphi 0, %s16
      %p13 = scmp.ge.s32.totalorder %s12, 4
      %s22 = sphi 0, %s24
      %s25 = sphi 0, %s22
      %s26 = sphi 0, %s25
      %s42 = sphi 0, %s26
      %s46 = sphi 0, %s46
      %s48 = sphi 0, %s46
      %s49 = sphi 0, %s48
      %s63 = sphi 0, %s49
      %s67 = sphi 0, %s67
      %s69 = sphi 0, %s67
      %s70 = sphi 0, %s69
      %s84 = sphi 0, %s70
      %s90 = sphi 0, %s92
      %s93 = sphi 0, %s90
      %s94 = sphi 0, %s93
      %s110 = sphi 0, %s94
    $region4: #{conv1x1_relu_clamp.1} parent=1 // loop_header_branch
      %15 = sbr.rel (%p13) target = $region8
    $region5: #{conv1x1_relu_clamp.1} parent=1 // loop_body
      %s17 = ssub.s32 %s12, 1
      %s18 = ssub.s32 %s12, 2
      %s19 = sadd.s32 %s12, 1
      %s20 = ssub.s32 %s12, %s19
      %p21 = scmp.eq.s32.totalorder %s20, 0
      %s23 = sadd.s32 %s22, 1
      %s24 = scalar_select %p21, %s22, %s23
      %p27 = pneg %p21
      %p28 = scmp.eq.s32.totalorder %s12, 1
      %p29 = por %p27, %p28
      %p30 = scmp.ne.s32.totalorder %s22, %s25
      %p31 = scmp.eq.s32.totalorder %s12, 0
      %p32 = por %p30, %p31
      %p33 = scmp.ne.s32.totalorder %s22, %s25
      %p34 = scmp.eq.s32.totalorder %s17, 1
      %p35 = por %p33, %p34
      %p36 = scmp.ne.s32.totalorder %s25, %s26
      %p37 = scmp.eq.s32.totalorder %s17, 0
      %p38 = por %p36, %p37
      %p39 = scmp.ne.s32.totalorder %s25, %s26
      %p40 = scmp.eq.s32.totalorder %s18, 1
      %p41 = por %p39, %p40
      %p43 = scmp.ne.s32.totalorder %s26, %s42
      %p44 = scmp.eq.s32.totalorder %s18, 0
      %p45 = por %p43, %p44
      %s47 = sadd.s32 %s46, 1
      %p50 = scmp.eq.s32.totalorder %s12, 1
      %p51 = scmp.ne.s32.totalorder %s46, %s48
      %p52 = scmp.eq.s32.totalorder %s12, 0
      %p53 = por %p51, %p52
      %p54 = scmp.ne.s32.totalorder %s46, %s48
      %p55 = scmp.eq.s32.totalorder %s17, 1
      %p56 = por %p54, %p55
      %p57 = scmp.ne.s32.totalorder %s48, %s49
      %p58 = scmp.eq.s32.totalorder %s17, 0
      %p59 = por %p57, %p58
      %p60 = scmp.ne.s32.totalorder %s48, %s49
      %p61 = scmp.eq.s32.totalorder %s18, 1
      %p62 = por %p60, %p61
      %p64 = scmp.ne.s32.totalorder %s49, %s63
      %p65 = scmp.eq.s32.totalorder %s18, 0
      %p66 = por %p64, %p65
      %s68 = sadd.s32 %s67, 1
      %p71 = scmp.eq.s32.totalorder %s12, 1
      %p72 = scmp.ne.s32.totalorder %s67, %s69
      %p73 = scmp.eq.s32.totalorder %s12, 0
      %p74 = por %p72, %p73
      %p75 = scmp.ne.s32.totalorder %s67, %s69
      %p76 = scmp.eq.s32.totalorder %s17, 1
      %p77 = por %p75, %p76
      %p78 = scmp.ne.s32.totalorder %s69, %s70
      %p79 = scmp.eq.s32.totalorder %s17, 0
      %p80 = por %p78, %p79
      %p81 = scmp.ne.s32.totalorder %s69, %s70
      %p82 = scmp.eq.s32.totalorder %s18, 1
      %p83 = por %p81, %p82
      %p85 = scmp.ne.s32.totalorder %s70, %s84
      %p86 = scmp.eq.s32.totalorder %s18, 0
      %p87 = por %p85, %p86
      %s88 = ssub.s32 %s12, %s19
      %p89 = scmp.eq.s32.totalorder %s88, 0
      %s91 = sadd.s32 %s90, 1
      %s92 = scalar_select %p89, %s90, %s91
      %p95 = pneg %p89
      %p96 = scmp.eq.s32.totalorder %s12, 1
      %p97 = por %p95, %p96
      %p98 = scmp.ne.s32.totalorder %s90, %s93
      %p99 = scmp.eq.s32.totalorder %s12, 0
      %p100 = por %p98, %p99
      %p101 = scmp.ne.s32.totalorder %s90, %s93
      %p102 = scmp.eq.s32.totalorder %s17, 1
      %p103 = por %p101, %p102
      %p104 = scmp.ne.s32.totalorder %s93, %s94
      %p105 = scmp.eq.s32.totalorder %s17, 0
      %p106 = por %p104, %p105
      %p107 = scmp.ne.s32.totalorder %s93, %s94
      %p108 = scmp.eq.s32.totalorder %s18, 1
      %p109 = por %p107, %p108
      %p111 = scmp.ne.s32.totalorder %s94, %s110
      %p112 = scmp.eq.s32.totalorder %s18, 0
      %p113 = por %p111, %p112
      %p114 = scmp.le.s32.totalorder 1, %s12
      %p115 = scmp.lt.s32.totalorder %s12, 3
      %p116 = pnand %p114, %p115
      %p117 = pneg %p116
      // Predicated region
      $region9: #{conv1x1_relu_clamp.1} parent=5 // pred_check
        _
      $region10: #{conv1x1_relu_clamp.1} parent=5 // pred_check_branch
        %119 = sbr.rel (%p116) target = $region12
      $region11: #{conv1x1_relu_clamp.1} parent=5 // pred_region
        %s120 = ssub.s32 %s12, 1
        // Predicated region
        $region13: #{conv1x1_relu_clamp.1} parent=11 // pred_check
          %p121 = pneg %p59
        $region14: #{conv1x1_relu_clamp.1} parent=11 // pred_check_branch
          %123 = sbr.rel (%p121) target = $region16
        $region15: #{conv1x1_relu_clamp.1} parent=11 // pred_region
          _
        $region16: #{conv1x1_relu_clamp.1} parent=11 // pred_fallthru
          _
        // Predicated region
        $region17: #{conv1x1_relu_clamp.1} parent=11 // pred_check
          %p124 = pneg %p80
        $region18: #{conv1x1_relu_clamp.1} parent=11 // pred_check_branch
          %126 = sbr.rel (%p124) target = $region20
        $region19: #{conv1x1_relu_clamp.1} parent=11 // pred_region
          _
        $region20: #{conv1x1_relu_clamp.1} parent=11 // pred_fallthru
          _
      $region12: #{conv1x1_relu_clamp.1} parent=5 // pred_fallthru
        _
      %p127 = scmp.lt.s32.totalorder %s12, 2
      // Predicated region
      $region21: #{conv1x1_relu_clamp.1} parent=5 // pred_check
        %p128 = pneg %p127
      $region22: #{conv1x1_relu_clamp.1} parent=5 // pred_check_branch
        %130 = sbr.rel (%p128) target = $region24
      $region23: #{conv1x1_relu_clamp.1} parent=5 // pred_region
        // Predicated region
        $region25: #{conv1x1_relu_clamp.1} parent=23 // pred_check
          %p131 = pneg %p32
        $region26: #{conv1x1_relu_clamp.1} parent=23 // pred_check_branch
          %133 = sbr.rel (%p131) target = $region28
        $region27: #{conv1x1_relu_clamp.1} parent=23 // pred_region
          %p134 = scmp.lt.s32.totalorder %s12, 1
          %s135 = scalar_select %p134, %s12, 1
          %s136 = smul.addr %s135, 4
          %s137 = scalar_lea.vmem %s0, %s136
        $region28: #{conv1x1_relu_clamp.1} parent=23 // pred_fallthru
          _
      $region24: #{conv1x1_relu_clamp.1} parent=5 // pred_fallthru
        _
      %p138 = scmp.le.s32.totalorder 1, %s12
      %p139 = scmp.lt.s32.totalorder %s12, 3
      %p140 = pnand %p138, %p139
      %p141 = pneg %p140
      // Predicated region
      $region29: #{conv1x1_relu_clamp.1} parent=5 // pred_check
        _
      $region30: #{conv1x1_relu_clamp.1} parent=5 // pred_check_branch
        %143 = sbr.rel (%p140) target = $region32
      $region31: #{conv1x1_relu_clamp.1} parent=5 // pred_region
        %s144 = ssub.s32 %s12, 1
        %p145 = scmp.lt.s32.totalorder %s17, 1
        %s146 = scalar_select %p145, %s17, 1
        %s147 = smul.addr %s146, 4
        %s148 = scalar_lea.vmem %s0, %s147
        %p149 = pneg %p38
        %p150 = pneg %p35
        %p151 = pneg %p59
        %p152 = pneg %p56
        %p153 = pneg %p80
        %p154 = pneg %p77
        %p155 = pneg %p106
        %p156 = pneg %p103
        %s157 = sand.u32 %s93, 1
        %s158 = scalar_lea.sflag [#allocation3], %s157
        %s159 = sand.u32 %s93, 1
        %s160 = smul.addr %s159, 8
        %s161 = scalar_lea.vmem [#allocation2], %s160
        %p162 = scmp.lt.s32.totalorder %s17, 1
        %s163 = scalar_select %p162, %s17, 1
        %s164 = smul.addr %s163, 4
        %s165 = scalar_lea.vmem %s0, %s164
        %v166 = vld [vmem:[%s165] sm:$0x7]
        %v167 = vld [vmem:[%s1] sm:$0xff]
        %v168 = vld [vmem:[%s2] sm:$0xff]
        %170 = vset.pattern.permute.xlu0 0
        %171 = vperm.xlu0 %170, %v167
        %v172 = vpop.permute.xlu0 %171
        %v174 = vlaneseq
        %v175 = vshrl.u32 %v174, 7
        %v176 = vsub.s32 0, %v175
        %v177 = vrot.slane %v166, %v176
        %v178 = vmul.f32 %v172, %v177
        %180 = vset.pattern.permute.xlu0 0
        %181 = vperm.xlu0 %180, %v168
        %v182 = vpop.permute.xlu0 %181
        %v184 = vadd.f32 %v182, %v178
        %185 = vset.pattern.permute.xlu0 1
        %186 = vperm.xlu0 %185, %v167
        %v187 = vpop.permute.xlu0 %186
        %v189 = vlaneseq
        %v190 = vshrl.u32 %v189, 7
        %v191 = vsub.s32 1, %v190
        %v192 = vrot.slane %v166, %v191
        %v193 = vmul.f32 %v187, %v192
        %v194 = vadd.f32 %v184, %v193
        %195 = vset.pattern.permute.xlu0 2
        %196 = vperm.xlu0 %195, %v167
        %v197 = vpop.permute.xlu0 %196
        %v199 = vlaneseq
        %v200 = vshrl.u32 %v199, 7
        %v201 = vsub.s32 2, %v200
        %v202 = vrot.slane %v166, %v201
        %v203 = vmul.f32 %v197, %v202
        %v204 = vadd.f32 %v194, %v203
        %v205 = vmax.f32 %v204, 0.0
        %v206 = vmin.f32 %v205, 0.75
        %207 = vst [vmem:[%s161] sm:$0xff] %v206
        %s208 = sand.u32 %s93, 1
        %s209 = scalar_lea.sflag [#allocation3], %s208
        %s210 = sand.u32 %s93, 1
        %s211 = smul.addr %s210, 8
        %s212 = scalar_lea.vmem [#allocation2], %s211
        // Predicated region
        $region33: #{conv1x1_relu_clamp.1} parent=31 // pred_check
          %p213 = pneg %p103
        $region34: #{conv1x1_relu_clamp.1} parent=31 // pred_check_branch
          %215 = sbr.rel (%p213) target = $region36
        $region35: #{conv1x1_relu_clamp.1} parent=31 // pred_region
          %s217 = ssub.s32 128, 128
          %218 = vsyncadd %s209, %s217
          %s219 = smul.addr %s17, 128
          %s220 = scalar_lea.hbm %s3, %s219
          %s222 = sshll.u32 %s212, 4
          %s223 = int_to_ptr.vmem [resolvable:$true] %s222
          %225 = dma.vmem_to_hbm [thread:$0]  %s223, 128, %s220, %s209
        $region36: #{conv1x1_relu_clamp.1} parent=31 // pred_fallthru
          _
      $region32: #{conv1x1_relu_clamp.1} parent=5 // pred_fallthru
        _
      %p226 = scmp.le.s32.totalorder 2, %s12
      // Predicated region
      $region37: #{conv1x1_relu_clamp.1} parent=5 // pred_check
        %p227 = pneg %p226
      $region38: #{conv1x1_relu_clamp.1} parent=5 // pred_check_branch
        %229 = sbr.rel (%p227) target = $region40
      $region39: #{conv1x1_relu_clamp.1} parent=5 // pred_region
        %s230 = ssub.s32 %s12, 2
        // Predicated region
        $region41: #{conv1x1_relu_clamp.1} parent=39 // pred_check
          %p231 = pneg %p109
        $region42: #{conv1x1_relu_clamp.1} parent=39 // pred_check_branch
          %233 = sbr.rel (%p231) target = $region44
        $region43: #{conv1x1_relu_clamp.1} parent=39 // pred_region
          %s234 = sand.u32 %s94, 1
          %s235 = scalar_lea.sflag [#allocation3], %s234
          %s236 = sand.u32 %s94, 1
          %s237 = smul.addr %s236, 8
          %s238 = scalar_lea.vmem [#allocation2], %s237
          %239 = dma.done %s235, 128
        $region44: #{conv1x1_relu_clamp.1} parent=39 // pred_fallthru
          _
      $region40: #{conv1x1_relu_clamp.1} parent=5 // pred_fallthru
        _
    $region6: #{conv1x1_relu_clamp.1} parent=1 // loop_footer
      %s16 = sadd.s32 1, %s12
    $region7: #{conv1x1_relu_clamp.1} parent=1 // loop_footer_branch
      %11 = sbr.rel target = $region3
    $region8: #{conv1x1_relu_clamp.1} parent=1 // loop_exit
      _
    %240 = vsyncpa [#allocation3], 1
    %s241 = scalar_lea.sflag [#allocation3], 1
    %242 = vsyncpa %s241, 1

</llo_original>
